<compile_context>
chip_gen: v5e
topology: v5e:2x2
jax: 0.10.0
libtpu: 0.0.40
codegen_flags: <defaults>
</compile_context>

<pallas_src>
import functools

import jax
import jax.numpy as jnp
from jax.experimental import pallas as pl
from jax.experimental.pallas import tpu as pltpu  # noqa: F401  (kept for TPU-specific tuning hooks)

# ---------------- config (small shapes consistent with the module) ----------
BATCH = 2
SEQ = 8
INPUT_DIM = 16
HIDDEN = 32            # hidden_dim
OUTPUT_DIM = 4
RECURRENT_LAYERS = 1   # single bidirectional layer
DROPOUT_P = 0.1        # identity at inference (eval mode)
BATCH_PAD = 8          # pad batch to a full 8-sublane vreg


# ---------------- fused forward kernel ---------------------------------------
def _attention_model_kernel(x_ref, w_ref, b_ref, o_ref, *,
                            batch, seq, hidden, in2, emb2):
    """Fused AttentionModel forward (inference).

    x_ref : (seq*batch, in2)  bf16   seq-major rows (t*batch + b); the feature
            axis carries [x(t), x(S-1-t)] so one projection serves both
            LSTM directions.
    w_ref : (in2 + emb2 + 2H + 4H, 8H) bf16  packed weight slab.
    b_ref : (8, 8H) f32  packed bias slab (row0 = emb, row1 = gates, row2 = label).
    o_ref : (batch, 8H) f32  logits live in lanes [0, OUTPUT_DIM).
    """
    BP, S, H = batch, seq, hidden
    f32, bf16 = jnp.float32, jnp.bfloat16

    # ---- static slices of the packed parameter slabs (one-time, hoisted) ----
    r0 = 0
    w_emb = w_ref[r0:r0 + in2, 0:emb2]; r0 += in2            # (2D, 2h2) bf16
    w_ih = w_ref[r0:r0 + emb2, :]; r0 += emb2                # (2h2, 8H) bf16
    w_hh = w_ref[r0:r0 + 2 * H, :]; r0 += 2 * H              # (2H, 8H)  bf16
    w_lbl = w_ref[r0:r0 + 4 * H, :]                          # (4H, 8H)  bf16

    bias = b_ref[...]                                        # (8, 8H) f32
    b_emb = bias[0:1, 0:emb2]
    b_gate = bias[1:2, :]
    b_lbl = bias[2:3, :]

    # 1) input_embeded + tanh, both time directions in one MXU pass
    #    (block-diagonal embed weights).
    emb = jnp.tanh(jnp.dot(x_ref[...], w_emb, preferred_element_type=f32)
                   + b_emb)                                  # (S*BP, 2h2) f32
    # TODO(synk): nn.Dropout(p=0.1) is identity in eval/inference mode.

    # 2) one MXU pass: input-side gate pre-activations for ALL timesteps and
    #    BOTH directions.  Gate lanes grouped [i_f,i_b | f_f,f_b | g_f,g_b |
    #    o_f,o_b]; i/f/o columns carry a 0.5 pre-scale folded into the weights
    #    (sigmoid-via-tanh trick).
    xproj = (jnp.dot(emb.astype(bf16), w_ih, preferred_element_type=f32)
             + b_gate)                                       # (S*BP, 8H) f32

    lane = jax.lax.broadcasted_iota(jnp.int32, (BP, 8 * H), 1)
    g_mask = (lane >= 4 * H) & (lane < 6 * H)                # tanh (g) lanes

    # 3) bidirectional LSTM; the 8-step chain is fully unrolled, state and
    #    per-step outputs carried in vregs (no scratch stores), one fused
    #    (BP,2H)@(2H,8H) bf16 MXU push per step.
    h = jnp.zeros((BP, 2 * H), f32)                          # [h_fwd, h_bwd]
    c = jnp.zeros((BP, 2 * H), f32)
    hs = []
    for s in range(S):
        row = s * BP
        pre = xproj[row:row + BP, :] + jnp.dot(
            h.astype(bf16), w_hh, preferred_element_type=f32)      # (BP, 8H)
        act = jnp.tanh(pre)                        # single EUP pass per step
        act = jnp.where(g_mask, act, 0.5 * act + 0.5)   # sigmoid lanes (VPU)
        i_g = act[:, 0:2 * H]
        f_g = act[:, 2 * H:4 * H]
        g_g = act[:, 4 * H:6 * H]
        o_g = act[:, 6 * H:8 * H]
        c = f_g * c + i_g * g_g
        h = o_g * jnp.tanh(c)
        hs.append(h)                   # hs[s] = [h_fwd(time s), h_bwd(time S-1-s)]

    fh = hs[-1]                        # (BP, 2H) = h_n of both directions

    # 4) attention against the final hidden state (pure VPU/XLU epilogue).
    #    lstm_output at time t = [h_fwd(t), h_bwd(t)]; the backward half is a
    #    static Python re-index of the unrolled list (no data reversal).
    out_t = [jnp.concatenate([hs[t][:, 0:H], hs[S - 1 - t][:, H:2 * H]],
                             axis=-1) for t in range(S)]            # (BP, 2H)
    scores = jnp.concatenate(
        [jnp.sum(out_t[t] * fh, axis=-1, keepdims=True) for t in range(S)],
        axis=-1)                                                     # (BP, S)
    m = jnp.max(scores, axis=-1, keepdims=True)
    e = jnp.exp(scores - m)
    soft = e * pl.reciprocal(jnp.sum(e, axis=-1, keepdims=True), approx=True)
    attn = out_t[0] * soft[:, 0:1]
    for t in range(1, S):
        attn = attn + out_t[t] * soft[:, t:t + 1]                    # (BP, 2H)

    # 5) logits = label(concat(attn_output, final_hidden))  [= attn_f, attn_b,
    #    fh_f, fh_b along features, matching the PyTorch cat order].
    final_inputs = jnp.concatenate([attn, fh], axis=-1)              # (BP, 4H)
    logits = jnp.dot(final_inputs.astype(bf16), w_lbl,
                     preferred_element_type=f32) + b_lbl             # (BP, 8H)
    o_ref[...] = logits.astype(o_ref.dtype)


def forward(params, x):
    B, S, D = x.shape
    BP = BATCH_PAD
    H = HIDDEN
    # Wrapper-side layout only (all tiny): pad batch to 8 sublanes, go
    # seq-major, and append the time-reversed copy along features so the
    # kernel never reverses or concatenates per step.
    xp = jnp.zeros((BP, S, D), x.dtype).at[:B, :, :].set(x)
    x_sm = jnp.transpose(xp, (1, 0, 2))                      # (S, BP, D)
    x2 = jnp.concatenate([x_sm, x_sm[::-1]], axis=-1)        # (S, BP, 2D)
    x2 = x2.reshape(S * BP, 2 * D).astype(jnp.bfloat16)

    flops = 2 * (S * BP * (2 * D) * H          # embed
                 + S * BP * H * (8 * H)        # input projection
                 + S * BP * (2 * H) * (8 * H)  # recurrence (fused dirs)
                 + BP * (4 * H) * (8 * H))     # label
    trans = S * BP * H + S * (BP * 8 * H + BP * 2 * H) + BP * S
    bytes_acc = (x2.size * 2 + params["w_all"].size * 2
                 + params["b_all"].size * 4 + BP * 8 * H * 4)

    out = pl.pallas_call(
        functools.partial(_attention_model_kernel, batch=BP, seq=S,
                          hidden=H, in2=2 * D, emb2=2 * (H // 2)),
        out_shape=jax.ShapeDtypeStruct((BP, 8 * H), jnp.float32),
        cost_estimate=pl.CostEstimate(flops=flops, transcendentals=trans,
                                      bytes_accessed=bytes_acc),
    )(x2, params["w_all"], params["b_all"])
    return out[:B, :OUTPUT_DIM]


# ---------------- parameter init (deterministic, PyTorch-style) -------------
def init_params(key):
    H, h2, D, OUT = HIDDEN, HIDDEN // 2, INPUT_DIM, OUTPUT_DIM
    f32 = jnp.float32
    ks = jax.random.split(key, 12)

    def unif(k, shape, fan_in):
        bound = 1.0 / (fan_in ** 0.5)
        return jax.random.uniform(k, shape, f32, -bound, bound)

    # input_embeded: Linear(input_dim, hidden//2)
    w_emb = unif(ks[0], (D, h2), D)
    b_emb = unif(ks[1], (h2,), D)

    # bidirectional LSTM, PyTorch gate order [i, f, g, o]; weights stored
    # transposed (in, 4H); forget-gate bias filled with 1.0 in BOTH bias_ih
    # and bias_hh as in the module __init__ (so combined forget bias = 2.0).
    ki = 2
    w_ih_d, w_hh_d, b_d = {}, {}, {}
    for d in ("fwd", "bwd"):
        w_ih_d[d] = unif(ks[ki], (h2, 4 * H), H); ki += 1
        w_hh_d[d] = unif(ks[ki], (H, 4 * H), H); ki += 1
        b_ih = unif(ks[ki], (4 * H,), H); ki += 1
        b_hh = unif(ks[ki], (4 * H,), H); ki += 1
        b_ih = b_ih.at[H:2 * H].set(1.0)
        b_hh = b_hh.at[H:2 * H].set(1.0)
        b_d[d] = b_ih + b_hh

    # label: Linear(hidden*4, output_dim)
    w_lbl = unif(ks[ki], (4 * H, OUT), 4 * H); ki += 1
    b_lbl = unif(ks[ki], (OUT,), 4 * H)
    # NOTE: self.output_linear exists in __init__ but is unused in forward.

    # ----- repack for the fused kernel --------------------------------------
    # gate-grouped lane layout: [i_f,i_b | f_f,f_b | g_f,g_b | o_f,o_b]
    def regroup(mf, mb):
        parts = []
        for q in range(4):
            parts.append(mf[..., q * H:(q + 1) * H])
            parts.append(mb[..., q * H:(q + 1) * H])
        return jnp.concatenate(parts, axis=-1)

    z_ih = jnp.zeros((h2, 4 * H), f32)
    z_hh = jnp.zeros((H, 4 * H), f32)
    w_ih_blk = jnp.concatenate([regroup(w_ih_d["fwd"], z_ih),
                                regroup(z_ih, w_ih_d["bwd"])], axis=0)  # (2h2,8H)
    w_hh_blk = jnp.concatenate([regroup(w_hh_d["fwd"], z_hh),
                                regroup(z_hh, w_hh_d["bwd"])], axis=0)  # (2H, 8H)
    b_gate = regroup(b_d["fwd"], b_d["bwd"])                            # (8H,)

    # sigmoid-via-tanh: pre-scale i/f/o columns by 0.5 so the kernel only
    # needs one tanh per cell (sigmoid(x) = 0.5*tanh(x/2) + 0.5 on those lanes).
    lane = jnp.arange(8 * H)
    sig_scale = jnp.where((lane >= 4 * H) & (lane < 6 * H), 1.0, 0.5).astype(f32)
    w_ih_blk = w_ih_blk * sig_scale
    w_hh_blk = w_hh_blk * sig_scale
    b_gate = b_gate * sig_scale

    # block-diagonal embedding weights: forward-time features -> first h2
    # lanes, reversed-time features -> last h2 lanes.
    w_emb_blk = jnp.zeros((2 * D, 2 * h2), f32)
    w_emb_blk = w_emb_blk.at[0:D, 0:h2].set(w_emb)
    w_emb_blk = w_emb_blk.at[D:2 * D, h2:2 * h2].set(w_emb)
    b_emb2 = jnp.concatenate([b_emb, b_emb])

    # one bf16 weight slab (MXU operands) + one f32 bias slab (VPU adds).
    rows = 2 * D + 2 * h2 + 2 * H + 4 * H
    w_all = jnp.zeros((rows, 8 * H), f32)
    r = 0
    w_all = w_all.at[r:r + 2 * D, 0:2 * h2].set(w_emb_blk); r += 2 * D
    w_all = w_all.at[r:r + 2 * h2, :].set(w_ih_blk); r += 2 * h2
    w_all = w_all.at[r:r + 2 * H, :].set(w_hh_blk); r += 2 * H
    w_all = w_all.at[r:r + 4 * H, 0:OUT].set(w_lbl)

    b_all = jnp.zeros((8, 8 * H), f32)
    b_all = b_all.at[0, 0:2 * h2].set(b_emb2)
    b_all = b_all.at[1, :].set(b_gate)
    b_all = b_all.at[2, 0:OUT].set(b_lbl)

    return {"w_all": w_all.astype(jnp.bfloat16), "b_all": b_all}


if __name__ == "__main__":
    key = jax.random.PRNGKey(0)
    pkey, xkey = jax.random.split(key)
    params = init_params(pkey)
    x = jax.random.normal(xkey, (BATCH, SEQ, INPUT_DIM), jnp.float32)

    logits = jax.jit(forward)(params, x)
    jax.block_until_ready(logits)
    assert logits.shape == (BATCH, OUTPUT_DIM)
    assert bool(jnp.all(jnp.isfinite(logits)))
    print("KERNEL_OK")
</pallas_src>

<mosaic_0001>
module attributes {stable_mosaic.version = 11 : i64} {
  func.func @_attention_model_kernel(%arg0: memref<64x32xbf16, #tpu.memory_space<vmem>>, %arg1: memref<256x256xbf16, #tpu.memory_space<vmem>>, %arg2: memref<8x256xf32, #tpu.memory_space<vmem>>, %arg3: memref<8x256xf32, #tpu.memory_space<vmem>>) attributes {dimension_semantics = [], scalar_prefetch = 0 : i64, scratch_operands = 0 : i64, tpu.core_type = #tpu.core_type<tc>} {
    %c0 = arith.constant 0 : index
    %c0_0 = arith.constant 0 : index
    %0 = vector.load %arg1[%c0, %c0_0] : memref<256x256xbf16, #tpu.memory_space<vmem>>, vector<32x32xbf16>
    %c32 = arith.constant 32 : index
    %c0_1 = arith.constant 0 : index
    %1 = vector.load %arg1[%c32, %c0_1] : memref<256x256xbf16, #tpu.memory_space<vmem>>, vector<32x256xbf16>
    %c64 = arith.constant 64 : index
    %c0_2 = arith.constant 0 : index
    %2 = vector.load %arg1[%c64, %c0_2] : memref<256x256xbf16, #tpu.memory_space<vmem>>, vector<64x256xbf16>
    %c128 = arith.constant 128 : index
    %c0_3 = arith.constant 0 : index
    %3 = vector.load %arg1[%c128, %c0_3] : memref<256x256xbf16, #tpu.memory_space<vmem>>, vector<128x256xbf16>
    %c0_4 = arith.constant 0 : index
    %c0_5 = arith.constant 0 : index
    %4 = vector.load %arg2[%c0_4, %c0_5] : memref<8x256xf32, #tpu.memory_space<vmem>>, vector<8x256xf32>
    %5 = vector.extract_strided_slice %4 {offsets = [0, 0], sizes = [1, 32], strides = [1, 1]} : vector<8x256xf32> to vector<1x32xf32>
    %6 = vector.extract_strided_slice %4 {offsets = [1, 0], sizes = [1, 256], strides = [1, 1]} : vector<8x256xf32> to vector<1x256xf32>
    %7 = vector.extract_strided_slice %4 {offsets = [2, 0], sizes = [1, 256], strides = [1, 1]} : vector<8x256xf32> to vector<1x256xf32>
    %c0_6 = arith.constant 0 : index
    %c0_7 = arith.constant 0 : index
    %8 = vector.load %arg0[%c0_6, %c0_7] : memref<64x32xbf16, #tpu.memory_space<vmem>>, vector<64x32xbf16>
    %cst = arith.constant dense<0.000000e+00> : vector<64x32xf32>
    %9 = tpu.matmul %8, %0, %cst {dimension_numbers = #tpu.dot_dimension_numbers<[1], [0], [0], [1], [0, 0, 1, 1], [], []>} : vector<64x32xbf16>, vector<32x32xbf16>, vector<64x32xf32> -> vector<64x32xf32>
    %10 = vector.broadcast %5 : vector<1x32xf32> to vector<64x32xf32>
    %11 = arith.addf %9, %10 : vector<64x32xf32>
    %12 = math.tanh %11 : vector<64x32xf32>
    %13 = arith.truncf %12 : vector<64x32xf32> to vector<64x32xbf16>
    %cst_8 = arith.constant dense<0.000000e+00> : vector<64x256xf32>
    %14 = tpu.matmul %13, %1, %cst_8 {dimension_numbers = #tpu.dot_dimension_numbers<[1], [0], [0], [1], [0, 0, 1, 1], [], []>} : vector<64x32xbf16>, vector<32x256xbf16>, vector<64x256xf32> -> vector<64x256xf32>
    %15 = vector.broadcast %6 : vector<1x256xf32> to vector<64x256xf32>
    %16 = arith.addf %14, %15 : vector<64x256xf32>
    %17 = tpu.iota {dimensions = array<i32: 1>} : vector<8x256xi32>
    %c128_i32 = arith.constant 128 : i32
    %18 = vector.broadcast %c128_i32 : i32 to vector<8x256xi32>
    %19 = arith.cmpi sge, %17, %18 : vector<8x256xi32>
    %c192_i32 = arith.constant 192 : i32
    %20 = vector.broadcast %c192_i32 : i32 to vector<8x256xi32>
    %21 = arith.cmpi slt, %17, %20 : vector<8x256xi32>
    %22 = arith.andi %19, %21 : vector<8x256xi1>
    %cst_9 = arith.constant 0.000000e+00 : f32
    %23 = vector.broadcast %cst_9 : f32 to vector<8x64xf32>
    %cst_10 = arith.constant 0.000000e+00 : f32
    %24 = vector.broadcast %cst_10 : f32 to vector<8x64xf32>
    %25 = vector.extract_strided_slice %16 {offsets = [0, 0], sizes = [8, 256], strides = [1, 1]} : vector<64x256xf32> to vector<8x256xf32>
    %26 = arith.truncf %23 : vector<8x64xf32> to vector<8x64xbf16>
    %cst_11 = arith.constant dense<0.000000e+00> : vector<8x256xf32>
    %27 = tpu.matmul %26, %2, %cst_11 {dimension_numbers = #tpu.dot_dimension_numbers<[1], [0], [0], [1], [0, 0, 1, 1], [], []>} : vector<8x64xbf16>, vector<64x256xbf16>, vector<8x256xf32> -> vector<8x256xf32>
    %28 = arith.addf %25, %27 : vector<8x256xf32>
    %29 = math.tanh %28 : vector<8x256xf32>
    %cst_12 = arith.constant 5.000000e-01 : f32
    %30 = vector.broadcast %cst_12 : f32 to vector<8x256xf32>
    %31 = arith.mulf %30, %29 : vector<8x256xf32>
    %cst_13 = arith.constant 5.000000e-01 : f32
    %32 = vector.broadcast %cst_13 : f32 to vector<8x256xf32>
    %33 = arith.addf %31, %32 : vector<8x256xf32>
    %34 = arith.select %22, %29, %33 : vector<8x256xi1>, vector<8x256xf32>
    %35 = vector.extract_strided_slice %34 {offsets = [0, 0], sizes = [8, 64], strides = [1, 1]} : vector<8x256xf32> to vector<8x64xf32>
    %36 = vector.extract_strided_slice %34 {offsets = [0, 64], sizes = [8, 64], strides = [1, 1]} : vector<8x256xf32> to vector<8x64xf32>
    %37 = vector.extract_strided_slice %34 {offsets = [0, 128], sizes = [8, 64], strides = [1, 1]} : vector<8x256xf32> to vector<8x64xf32>
    %38 = vector.extract_strided_slice %34 {offsets = [0, 192], sizes = [8, 64], strides = [1, 1]} : vector<8x256xf32> to vector<8x64xf32>
    %39 = arith.mulf %36, %24 : vector<8x64xf32>
    %40 = arith.mulf %35, %37 : vector<8x64xf32>
    %41 = arith.addf %39, %40 : vector<8x64xf32>
    %42 = math.tanh %41 : vector<8x64xf32>
    %43 = arith.mulf %38, %42 : vector<8x64xf32>
    %44 = vector.extract_strided_slice %16 {offsets = [8, 0], sizes = [8, 256], strides = [1, 1]} : vector<64x256xf32> to vector<8x256xf32>
    %45 = arith.truncf %43 : vector<8x64xf32> to vector<8x64xbf16>
    %cst_14 = arith.constant dense<0.000000e+00> : vector<8x256xf32>
    %46 = tpu.matmul %45, %2, %cst_14 {dimension_numbers = #tpu.dot_dimension_numbers<[1], [0], [0], [1], [0, 0, 1, 1], [], []>} : vector<8x64xbf16>, vector<64x256xbf16>, vector<8x256xf32> -> vector<8x256xf32>
    %47 = arith.addf %44, %46 : vector<8x256xf32>
    %48 = math.tanh %47 : vector<8x256xf32>
    %cst_15 = arith.constant 5.000000e-01 : f32
    %49 = vector.broadcast %cst_15 : f32 to vector<8x256xf32>
    %50 = arith.mulf %49, %48 : vector<8x256xf32>
    %cst_16 = arith.constant 5.000000e-01 : f32
    %51 = vector.broadcast %cst_16 : f32 to vector<8x256xf32>
    %52 = arith.addf %50, %51 : vector<8x256xf32>
    %53 = arith.select %22, %48, %52 : vector<8x256xi1>, vector<8x256xf32>
    %54 = vector.extract_strided_slice %53 {offsets = [0, 0], sizes = [8, 64], strides = [1, 1]} : vector<8x256xf32> to vector<8x64xf32>
    %55 = vector.extract_strided_slice %53 {offsets = [0, 64], sizes = [8, 64], strides = [1, 1]} : vector<8x256xf32> to vector<8x64xf32>
    %56 = vector.extract_strided_slice %53 {offsets = [0, 128], sizes = [8, 64], strides = [1, 1]} : vector<8x256xf32> to vector<8x64xf32>
    %57 = vector.extract_strided_slice %53 {offsets = [0, 192], sizes = [8, 64], strides = [1, 1]} : vector<8x256xf32> to vector<8x64xf32>
    %58 = arith.mulf %55, %41 : vector<8x64xf32>
    %59 = arith.mulf %54, %56 : vector<8x64xf32>
    %60 = arith.addf %58, %59 : vector<8x64xf32>
    %61 = math.tanh %60 : vector<8x64xf32>
    %62 = arith.mulf %57, %61 : vector<8x64xf32>
    %63 = vector.extract_strided_slice %16 {offsets = [16, 0], sizes = [8, 256], strides = [1, 1]} : vector<64x256xf32> to vector<8x256xf32>
    %64 = arith.truncf %62 : vector<8x64xf32> to vector<8x64xbf16>
    %cst_17 = arith.constant dense<0.000000e+00> : vector<8x256xf32>
    %65 = tpu.matmul %64, %2, %cst_17 {dimension_numbers = #tpu.dot_dimension_numbers<[1], [0], [0], [1], [0, 0, 1, 1], [], []>} : vector<8x64xbf16>, vector<64x256xbf16>, vector<8x256xf32> -> vector<8x256xf32>
    %66 = arith.addf %63, %65 : vector<8x256xf32>
    %67 = math.tanh %66 : vector<8x256xf32>
    %cst_18 = arith.constant 5.000000e-01 : f32
    %68 = vector.broadcast %cst_18 : f32 to vector<8x256xf32>
    %69 = arith.mulf %68, %67 : vector<8x256xf32>
    %cst_19 = arith.constant 5.000000e-01 : f32
    %70 = vector.broadcast %cst_19 : f32 to vector<8x256xf32>
    %71 = arith.addf %69, %70 : vector<8x256xf32>
    %72 = arith.select %22, %67, %71 : vector<8x256xi1>, vector<8x256xf32>
    %73 = vector.extract_strided_slice %72 {offsets = [0, 0], sizes = [8, 64], strides = [1, 1]} : vector<8x256xf32> to vector<8x64xf32>
    %74 = vector.extract_strided_slice %72 {offsets = [0, 64], sizes = [8, 64], strides = [1, 1]} : vector<8x256xf32> to vector<8x64xf32>
    %75 = vector.extract_strided_slice %72 {offsets = [0, 128], sizes = [8, 64], strides = [1, 1]} : vector<8x256xf32> to vector<8x64xf32>
    %76 = vector.extract_strided_slice %72 {offsets = [0, 192], sizes = [8, 64], strides = [1, 1]} : vector<8x256xf32> to vector<8x64xf32>
    %77 = arith.mulf %74, %60 : vector<8x64xf32>
    %78 = arith.mulf %73, %75 : vector<8x64xf32>
    %79 = arith.addf %77, %78 : vector<8x64xf32>
    %80 = math.tanh %79 : vector<8x64xf32>
    %81 = arith.mulf %76, %80 : vector<8x64xf32>
    %82 = vector.extract_strided_slice %16 {offsets = [24, 0], sizes = [8, 256], strides = [1, 1]} : vector<64x256xf32> to vector<8x256xf32>
    %83 = arith.truncf %81 : vector<8x64xf32> to vector<8x64xbf16>
    %cst_20 = arith.constant dense<0.000000e+00> : vector<8x256xf32>
    %84 = tpu.matmul %83, %2, %cst_20 {dimension_numbers = #tpu.dot_dimension_numbers<[1], [0], [0], [1], [0, 0, 1, 1], [], []>} : vector<8x64xbf16>, vector<64x256xbf16>, vector<8x256xf32> -> vector<8x256xf32>
    %85 = arith.addf %82, %84 : vector<8x256xf32>
    %86 = math.tanh %85 : vector<8x256xf32>
    %cst_21 = arith.constant 5.000000e-01 : f32
    %87 = vector.broadcast %cst_21 : f32 to vector<8x256xf32>
    %88 = arith.mulf %87, %86 : vector<8x256xf32>
    %cst_22 = arith.constant 5.000000e-01 : f32
    %89 = vector.broadcast %cst_22 : f32 to vector<8x256xf32>
    %90 = arith.addf %88, %89 : vector<8x256xf32>
    %91 = arith.select %22, %86, %90 : vector<8x256xi1>, vector<8x256xf32>
    %92 = vector.extract_strided_slice %91 {offsets = [0, 0], sizes = [8, 64], strides = [1, 1]} : vector<8x256xf32> to vector<8x64xf32>
    %93 = vector.extract_strided_slice %91 {offsets = [0, 64], sizes = [8, 64], strides = [1, 1]} : vector<8x256xf32> to vector<8x64xf32>
    %94 = vector.extract_strided_slice %91 {offsets = [0, 128], sizes = [8, 64], strides = [1, 1]} : vector<8x256xf32> to vector<8x64xf32>
    %95 = vector.extract_strided_slice %91 {offsets = [0, 192], sizes = [8, 64], strides = [1, 1]} : vector<8x256xf32> to vector<8x64xf32>
    %96 = arith.mulf %93, %79 : vector<8x64xf32>
    %97 = arith.mulf %92, %94 : vector<8x64xf32>
    %98 = arith.addf %96, %97 : vector<8x64xf32>
    %99 = math.tanh %98 : vector<8x64xf32>
    %100 = arith.mulf %95, %99 : vector<8x64xf32>
    %101 = vector.extract_strided_slice %16 {offsets = [32, 0], sizes = [8, 256], strides = [1, 1]} : vector<64x256xf32> to vector<8x256xf32>
    %102 = arith.truncf %100 : vector<8x64xf32> to vector<8x64xbf16>
    %cst_23 = arith.constant dense<0.000000e+00> : vector<8x256xf32>
    %103 = tpu.matmul %102, %2, %cst_23 {dimension_numbers = #tpu.dot_dimension_numbers<[1], [0], [0], [1], [0, 0, 1, 1], [], []>} : vector<8x64xbf16>, vector<64x256xbf16>, vector<8x256xf32> -> vector<8x256xf32>
    %104 = arith.addf %101, %103 : vector<8x256xf32>
    %105 = math.tanh %104 : vector<8x256xf32>
    %cst_24 = arith.constant 5.000000e-01 : f32
    %106 = vector.broadcast %cst_24 : f32 to vector<8x256xf32>
    %107 = arith.mulf %106, %105 : vector<8x256xf32>
    %cst_25 = arith.constant 5.000000e-01 : f32
    %108 = vector.broadcast %cst_25 : f32 to vector<8x256xf32>
    %109 = arith.addf %107, %108 : vector<8x256xf32>
    %110 = arith.select %22, %105, %109 : vector<8x256xi1>, vector<8x256xf32>
    %111 = vector.extract_strided_slice %110 {offsets = [0, 0], sizes = [8, 64], strides = [1, 1]} : vector<8x256xf32> to vector<8x64xf32>
    %112 = vector.extract_strided_slice %110 {offsets = [0, 64], sizes = [8, 64], strides = [1, 1]} : vector<8x256xf32> to vector<8x64xf32>
    %113 = vector.extract_strided_slice %110 {offsets = [0, 128], sizes = [8, 64], strides = [1, 1]} : vector<8x256xf32> to vector<8x64xf32>
    %114 = vector.extract_strided_slice %110 {offsets = [0, 192], sizes = [8, 64], strides = [1, 1]} : vector<8x256xf32> to vector<8x64xf32>
    %115 = arith.mulf %112, %98 : vector<8x64xf32>
    %116 = arith.mulf %111, %113 : vector<8x64xf32>
    %117 = arith.addf %115, %116 : vector<8x64xf32>
    %118 = math.tanh %117 : vector<8x64xf32>
    %119 = arith.mulf %114, %118 : vector<8x64xf32>
    %120 = vector.extract_strided_slice %16 {offsets = [40, 0], sizes = [8, 256], strides = [1, 1]} : vector<64x256xf32> to vector<8x256xf32>
    %121 = arith.truncf %119 : vector<8x64xf32> to vector<8x64xbf16>
    %cst_26 = arith.constant dense<0.000000e+00> : vector<8x256xf32>
    %122 = tpu.matmul %121, %2, %cst_26 {dimension_numbers = #tpu.dot_dimension_numbers<[1], [0], [0], [1], [0, 0, 1, 1], [], []>} : vector<8x64xbf16>, vector<64x256xbf16>, vector<8x256xf32> -> vector<8x256xf32>
    %123 = arith.addf %120, %122 : vector<8x256xf32>
    %124 = math.tanh %123 : vector<8x256xf32>
    %cst_27 = arith.constant 5.000000e-01 : f32
    %125 = vector.broadcast %cst_27 : f32 to vector<8x256xf32>
    %126 = arith.mulf %125, %124 : vector<8x256xf32>
    %cst_28 = arith.constant 5.000000e-01 : f32
    %127 = vector.broadcast %cst_28 : f32 to vector<8x256xf32>
    %128 = arith.addf %126, %127 : vector<8x256xf32>
    %129 = arith.select %22, %124, %128 : vector<8x256xi1>, vector<8x256xf32>
    %130 = vector.extract_strided_slice %129 {offsets = [0, 0], sizes = [8, 64], strides = [1, 1]} : vector<8x256xf32> to vector<8x64xf32>
    %131 = vector.extract_strided_slice %129 {offsets = [0, 64], sizes = [8, 64], strides = [1, 1]} : vector<8x256xf32> to vector<8x64xf32>
    %132 = vector.extract_strided_slice %129 {offsets = [0, 128], sizes = [8, 64], strides = [1, 1]} : vector<8x256xf32> to vector<8x64xf32>
    %133 = vector.extract_strided_slice %129 {offsets = [0, 192], sizes = [8, 64], strides = [1, 1]} : vector<8x256xf32> to vector<8x64xf32>
    %134 = arith.mulf %131, %117 : vector<8x64xf32>
    %135 = arith.mulf %130, %132 : vector<8x64xf32>
    %136 = arith.addf %134, %135 : vector<8x64xf32>
    %137 = math.tanh %136 : vector<8x64xf32>
    %138 = arith.mulf %133, %137 : vector<8x64xf32>
    %139 = vector.extract_strided_slice %16 {offsets = [48, 0], sizes = [8, 256], strides = [1, 1]} : vector<64x256xf32> to vector<8x256xf32>
    %140 = arith.truncf %138 : vector<8x64xf32> to vector<8x64xbf16>
    %cst_29 = arith.constant dense<0.000000e+00> : vector<8x256xf32>
    %141 = tpu.matmul %140, %2, %cst_29 {dimension_numbers = #tpu.dot_dimension_numbers<[1], [0], [0], [1], [0, 0, 1, 1], [], []>} : vector<8x64xbf16>, vector<64x256xbf16>, vector<8x256xf32> -> vector<8x256xf32>
    %142 = arith.addf %139, %141 : vector<8x256xf32>
    %143 = math.tanh %142 : vector<8x256xf32>
    %cst_30 = arith.constant 5.000000e-01 : f32
    %144 = vector.broadcast %cst_30 : f32 to vector<8x256xf32>
    %145 = arith.mulf %144, %143 : vector<8x256xf32>
    %cst_31 = arith.constant 5.000000e-01 : f32
    %146 = vector.broadcast %cst_31 : f32 to vector<8x256xf32>
    %147 = arith.addf %145, %146 : vector<8x256xf32>
    %148 = arith.select %22, %143, %147 : vector<8x256xi1>, vector<8x256xf32>
    %149 = vector.extract_strided_slice %148 {offsets = [0, 0], sizes = [8, 64], strides = [1, 1]} : vector<8x256xf32> to vector<8x64xf32>
    %150 = vector.extract_strided_slice %148 {offsets = [0, 64], sizes = [8, 64], strides = [1, 1]} : vector<8x256xf32> to vector<8x64xf32>
    %151 = vector.extract_strided_slice %148 {offsets = [0, 128], sizes = [8, 64], strides = [1, 1]} : vector<8x256xf32> to vector<8x64xf32>
    %152 = vector.extract_strided_slice %148 {offsets = [0, 192], sizes = [8, 64], strides = [1, 1]} : vector<8x256xf32> to vector<8x64xf32>
    %153 = arith.mulf %150, %136 : vector<8x64xf32>
    %154 = arith.mulf %149, %151 : vector<8x64xf32>
    %155 = arith.addf %153, %154 : vector<8x64xf32>
    %156 = math.tanh %155 : vector<8x64xf32>
    %157 = arith.mulf %152, %156 : vector<8x64xf32>
    %158 = vector.extract_strided_slice %16 {offsets = [56, 0], sizes = [8, 256], strides = [1, 1]} : vector<64x256xf32> to vector<8x256xf32>
    %159 = arith.truncf %157 : vector<8x64xf32> to vector<8x64xbf16>
    %cst_32 = arith.constant dense<0.000000e+00> : vector<8x256xf32>
    %160 = tpu.matmul %159, %2, %cst_32 {dimension_numbers = #tpu.dot_dimension_numbers<[1], [0], [0], [1], [0, 0, 1, 1], [], []>} : vector<8x64xbf16>, vector<64x256xbf16>, vector<8x256xf32> -> vector<8x256xf32>
    %161 = arith.addf %158, %160 : vector<8x256xf32>
    %162 = math.tanh %161 : vector<8x256xf32>
    %cst_33 = arith.constant 5.000000e-01 : f32
    %163 = vector.broadcast %cst_33 : f32 to vector<8x256xf32>
    %164 = arith.mulf %163, %162 : vector<8x256xf32>
    %cst_34 = arith.constant 5.000000e-01 : f32
    %165 = vector.broadcast %cst_34 : f32 to vector<8x256xf32>
    %166 = arith.addf %164, %165 : vector<8x256xf32>
    %167 = arith.select %22, %162, %166 : vector<8x256xi1>, vector<8x256xf32>
    %168 = vector.extract_strided_slice %167 {offsets = [0, 0], sizes = [8, 64], strides = [1, 1]} : vector<8x256xf32> to vector<8x64xf32>
    %169 = vector.extract_strided_slice %167 {offsets = [0, 64], sizes = [8, 64], strides = [1, 1]} : vector<8x256xf32> to vector<8x64xf32>
    %170 = vector.extract_strided_slice %167 {offsets = [0, 128], sizes = [8, 64], strides = [1, 1]} : vector<8x256xf32> to vector<8x64xf32>
    %171 = vector.extract_strided_slice %167 {offsets = [0, 192], sizes = [8, 64], strides = [1, 1]} : vector<8x256xf32> to vector<8x64xf32>
    %172 = arith.mulf %169, %155 : vector<8x64xf32>
    %173 = arith.mulf %168, %170 : vector<8x64xf32>
    %174 = arith.addf %172, %173 : vector<8x64xf32>
    %175 = math.tanh %174 : vector<8x64xf32>
    %176 = arith.mulf %171, %175 : vector<8x64xf32>
    %177 = vector.extract_strided_slice %43 {offsets = [0, 0], sizes = [8, 32], strides = [1, 1]} : vector<8x64xf32> to vector<8x32xf32>
    %178 = vector.extract_strided_slice %176 {offsets = [0, 32], sizes = [8, 32], strides = [1, 1]} : vector<8x64xf32> to vector<8x32xf32>
    %179 = tpu.concatenate %177, %178 in 1 : vector<8x32xf32>, vector<8x32xf32> -> vector<8x64xf32>
    %180 = vector.extract_strided_slice %62 {offsets = [0, 0], sizes = [8, 32], strides = [1, 1]} : vector<8x64xf32> to vector<8x32xf32>
    %181 = vector.extract_strided_slice %157 {offsets = [0, 32], sizes = [8, 32], strides = [1, 1]} : vector<8x64xf32> to vector<8x32xf32>
    %182 = tpu.concatenate %180, %181 in 1 : vector<8x32xf32>, vector<8x32xf32> -> vector<8x64xf32>
    %183 = vector.extract_strided_slice %81 {offsets = [0, 0], sizes = [8, 32], strides = [1, 1]} : vector<8x64xf32> to vector<8x32xf32>
    %184 = vector.extract_strided_slice %138 {offsets = [0, 32], sizes = [8, 32], strides = [1, 1]} : vector<8x64xf32> to vector<8x32xf32>
    %185 = tpu.concatenate %183, %184 in 1 : vector<8x32xf32>, vector<8x32xf32> -> vector<8x64xf32>
    %186 = vector.extract_strided_slice %100 {offsets = [0, 0], sizes = [8, 32], strides = [1, 1]} : vector<8x64xf32> to vector<8x32xf32>
    %187 = vector.extract_strided_slice %119 {offsets = [0, 32], sizes = [8, 32], strides = [1, 1]} : vector<8x64xf32> to vector<8x32xf32>
    %188 = tpu.concatenate %186, %187 in 1 : vector<8x32xf32>, vector<8x32xf32> -> vector<8x64xf32>
    %189 = vector.extract_strided_slice %119 {offsets = [0, 0], sizes = [8, 32], strides = [1, 1]} : vector<8x64xf32> to vector<8x32xf32>
    %190 = vector.extract_strided_slice %100 {offsets = [0, 32], sizes = [8, 32], strides = [1, 1]} : vector<8x64xf32> to vector<8x32xf32>
    %191 = tpu.concatenate %189, %190 in 1 : vector<8x32xf32>, vector<8x32xf32> -> vector<8x64xf32>
    %192 = vector.extract_strided_slice %138 {offsets = [0, 0], sizes = [8, 32], strides = [1, 1]} : vector<8x64xf32> to vector<8x32xf32>
    %193 = vector.extract_strided_slice %81 {offsets = [0, 32], sizes = [8, 32], strides = [1, 1]} : vector<8x64xf32> to vector<8x32xf32>
    %194 = tpu.concatenate %192, %193 in 1 : vector<8x32xf32>, vector<8x32xf32> -> vector<8x64xf32>
    %195 = vector.extract_strided_slice %157 {offsets = [0, 0], sizes = [8, 32], strides = [1, 1]} : vector<8x64xf32> to vector<8x32xf32>
    %196 = vector.extract_strided_slice %62 {offsets = [0, 32], sizes = [8, 32], strides = [1, 1]} : vector<8x64xf32> to vector<8x32xf32>
    %197 = tpu.concatenate %195, %196 in 1 : vector<8x32xf32>, vector<8x32xf32> -> vector<8x64xf32>
    %198 = vector.extract_strided_slice %176 {offsets = [0, 0], sizes = [8, 32], strides = [1, 1]} : vector<8x64xf32> to vector<8x32xf32>
    %199 = vector.extract_strided_slice %43 {offsets = [0, 32], sizes = [8, 32], strides = [1, 1]} : vector<8x64xf32> to vector<8x32xf32>
    %200 = tpu.concatenate %198, %199 in 1 : vector<8x32xf32>, vector<8x32xf32> -> vector<8x64xf32>
    %201 = arith.mulf %179, %176 : vector<8x64xf32>
    %cst_35 = arith.constant dense<0.000000e+00> : vector<8xf32>
    %202 = vector.multi_reduction <add>, %201, %cst_35 [1] : vector<8x64xf32> to vector<8xf32>
    %203 = vector.shape_cast %202 : vector<8xf32> to vector<8x1xf32>
    %204 = arith.mulf %182, %176 : vector<8x64xf32>
    %cst_36 = arith.constant dense<0.000000e+00> : vector<8xf32>
    %205 = vector.multi_reduction <add>, %204, %cst_36 [1] : vector<8x64xf32> to vector<8xf32>
    %206 = vector.shape_cast %205 : vector<8xf32> to vector<8x1xf32>
    %207 = arith.mulf %185, %176 : vector<8x64xf32>
    %cst_37 = arith.constant dense<0.000000e+00> : vector<8xf32>
    %208 = vector.multi_reduction <add>, %207, %cst_37 [1] : vector<8x64xf32> to vector<8xf32>
    %209 = vector.shape_cast %208 : vector<8xf32> to vector<8x1xf32>
    %210 = arith.mulf %188, %176 : vector<8x64xf32>
    %cst_38 = arith.constant dense<0.000000e+00> : vector<8xf32>
    %211 = vector.multi_reduction <add>, %210, %cst_38 [1] : vector<8x64xf32> to vector<8xf32>
    %212 = vector.shape_cast %211 : vector<8xf32> to vector<8x1xf32>
    %213 = arith.mulf %191, %176 : vector<8x64xf32>
    %cst_39 = arith.constant dense<0.000000e+00> : vector<8xf32>
    %214 = vector.multi_reduction <add>, %213, %cst_39 [1] : vector<8x64xf32> to vector<8xf32>
    %215 = vector.shape_cast %214 : vector<8xf32> to vector<8x1xf32>
    %216 = arith.mulf %194, %176 : vector<8x64xf32>
    %cst_40 = arith.constant dense<0.000000e+00> : vector<8xf32>
    %217 = vector.multi_reduction <add>, %216, %cst_40 [1] : vector<8x64xf32> to vector<8xf32>
    %218 = vector.shape_cast %217 : vector<8xf32> to vector<8x1xf32>
    %219 = arith.mulf %197, %176 : vector<8x64xf32>
    %cst_41 = arith.constant dense<0.000000e+00> : vector<8xf32>
    %220 = vector.multi_reduction <add>, %219, %cst_41 [1] : vector<8x64xf32> to vector<8xf32>
    %221 = vector.shape_cast %220 : vector<8xf32> to vector<8x1xf32>
    %222 = arith.mulf %200, %176 : vector<8x64xf32>
    %cst_42 = arith.constant dense<0.000000e+00> : vector<8xf32>
    %223 = vector.multi_reduction <add>, %222, %cst_42 [1] : vector<8x64xf32> to vector<8xf32>
    %224 = vector.shape_cast %223 : vector<8xf32> to vector<8x1xf32>
    %225 = tpu.concatenate %203, %206, %209, %212, %215, %218, %221, %224 in 1 : vector<8x1xf32>, vector<8x1xf32>, vector<8x1xf32>, vector<8x1xf32>, vector<8x1xf32>, vector<8x1xf32>, vector<8x1xf32>, vector<8x1xf32> -> vector<8x8xf32>
    %cst_43 = arith.constant dense<0xFF800000> : vector<8xf32>
    %226 = vector.multi_reduction <maximumf>, %225, %cst_43 [1] : vector<8x8xf32> to vector<8xf32>
    %227 = vector.shape_cast %226 : vector<8xf32> to vector<8x1xf32>
    %228 = vector.broadcast %227 : vector<8x1xf32> to vector<8x8xf32>
    %229 = arith.subf %225, %228 : vector<8x8xf32>
    %230 = math.exp %229 : vector<8x8xf32>
    %cst_44 = arith.constant dense<0.000000e+00> : vector<8xf32>
    %231 = vector.multi_reduction <add>, %230, %cst_44 [1] : vector<8x8xf32> to vector<8xf32>
    %232 = vector.shape_cast %231 : vector<8xf32> to vector<8x1xf32>
    %233 = tpu.reciprocal %232 {approx = true} : vector<8x1xf32> -> vector<8x1xf32>
    %234 = vector.broadcast %233 : vector<8x1xf32> to vector<8x8xf32>
    %235 = arith.mulf %230, %234 : vector<8x8xf32>
    %236 = vector.extract_strided_slice %235 {offsets = [0, 0], sizes = [8, 1], strides = [1, 1]} : vector<8x8xf32> to vector<8x1xf32>
    %237 = vector.broadcast %236 : vector<8x1xf32> to vector<8x64xf32>
    %238 = arith.mulf %179, %237 : vector<8x64xf32>
    %239 = vector.extract_strided_slice %235 {offsets = [0, 1], sizes = [8, 1], strides = [1, 1]} : vector<8x8xf32> to vector<8x1xf32>
    %240 = vector.broadcast %239 : vector<8x1xf32> to vector<8x64xf32>
    %241 = arith.mulf %182, %240 : vector<8x64xf32>
    %242 = arith.addf %238, %241 : vector<8x64xf32>
    %243 = vector.extract_strided_slice %235 {offsets = [0, 2], sizes = [8, 1], strides = [1, 1]} : vector<8x8xf32> to vector<8x1xf32>
    %244 = vector.broadcast %243 : vector<8x1xf32> to vector<8x64xf32>
    %245 = arith.mulf %185, %244 : vector<8x64xf32>
    %246 = arith.addf %242, %245 : vector<8x64xf32>
    %247 = vector.extract_strided_slice %235 {offsets = [0, 3], sizes = [8, 1], strides = [1, 1]} : vector<8x8xf32> to vector<8x1xf32>
    %248 = vector.broadcast %247 : vector<8x1xf32> to vector<8x64xf32>
    %249 = arith.mulf %188, %248 : vector<8x64xf32>
    %250 = arith.addf %246, %249 : vector<8x64xf32>
    %251 = vector.extract_strided_slice %235 {offsets = [0, 4], sizes = [8, 1], strides = [1, 1]} : vector<8x8xf32> to vector<8x1xf32>
    %252 = vector.broadcast %251 : vector<8x1xf32> to vector<8x64xf32>
    %253 = arith.mulf %191, %252 : vector<8x64xf32>
    %254 = arith.addf %250, %253 : vector<8x64xf32>
    %255 = vector.extract_strided_slice %235 {offsets = [0, 5], sizes = [8, 1], strides = [1, 1]} : vector<8x8xf32> to vector<8x1xf32>
    %256 = vector.broadcast %255 : vector<8x1xf32> to vector<8x64xf32>
    %257 = arith.mulf %194, %256 : vector<8x64xf32>
    %258 = arith.addf %254, %257 : vector<8x64xf32>
    %259 = vector.extract_strided_slice %235 {offsets = [0, 6], sizes = [8, 1], strides = [1, 1]} : vector<8x8xf32> to vector<8x1xf32>
    %260 = vector.broadcast %259 : vector<8x1xf32> to vector<8x64xf32>
    %261 = arith.mulf %197, %260 : vector<8x64xf32>
    %262 = arith.addf %258, %261 : vector<8x64xf32>
    %263 = vector.extract_strided_slice %235 {offsets = [0, 7], sizes = [8, 1], strides = [1, 1]} : vector<8x8xf32> to vector<8x1xf32>
    %264 = vector.broadcast %263 : vector<8x1xf32> to vector<8x64xf32>
    %265 = arith.mulf %200, %264 : vector<8x64xf32>
    %266 = arith.addf %262, %265 : vector<8x64xf32>
    %267 = tpu.concatenate %266, %176 in 1 : vector<8x64xf32>, vector<8x64xf32> -> vector<8x128xf32>
    %268 = arith.truncf %267 : vector<8x128xf32> to vector<8x128xbf16>
    %cst_45 = arith.constant dense<0.000000e+00> : vector<8x256xf32>
    %269 = tpu.matmul %268, %3, %cst_45 {dimension_numbers = #tpu.dot_dimension_numbers<[1], [0], [0], [1], [0, 0, 1, 1], [], []>} : vector<8x128xbf16>, vector<128x256xbf16>, vector<8x256xf32> -> vector<8x256xf32>
    %270 = vector.broadcast %7 : vector<1x256xf32> to vector<8x256xf32>
    %271 = arith.addf %269, %270 : vector<8x256xf32>
    %c0_46 = arith.constant 0 : index
    %c0_47 = arith.constant 0 : index
    %272 = vector.load %arg3[%c0_46, %c0_47] : memref<8x256xf32, #tpu.memory_space<vmem>>, vector<8x256xf32>
    tpu.vector_store %arg3[%c0_46, %c0_47], %271 {strides = array<i32>} : memref<8x256xf32, #tpu.memory_space<vmem>>, vector<8x256xf32>,
    return
  }
}

</mosaic_0001>

<llo_original>
// kernel: forward.1
$region0: #{forward.1}
  #allocation0 [shape = 'u32[]', space=smem, size = 0x4, offset = 0x4, fixed_abs, tag = 'smem constant byte address 0x4 - core index']
  #allocation1 [shape = 'u32[72,128]{1,0:T(1,128)}', space=vmem, size = 0x9000, scoped, tag = 'internal scratch']
  %s0 = inlined_call_operand.vmem [shape: bf16[64,32], index: 0, kind: input, shape index: {}]
  %s1 = inlined_call_operand.vmem [shape: bf16[256,256], index: 1, kind: input, shape index: {}]
  %s2 = inlined_call_operand.vmem [shape: f32[8,256], index: 2, kind: input, shape index: {}]
  %s3 = inlined_call_operand.vmem [shape: f32[8,256], index: 3, kind: output, shape index: {}]
  %s4 = sld [smem:[#allocation0]]
  $region22: #{forward.1} parent=0
    _
  %s6 = ssub.s32 1, %s4
  %s7 = scalar_select 0, %s6, %s4
  // Predicated region
  $region2: #{forward.1} parent=0 // pred_check
    _
  $region3: #{forward.1} parent=0 // pred_check_branch
    %9 = sbr.rel (0) target = $region5
  $region4: #{forward.1} parent=0 // pred_region
    _
  $region5: #{forward.1} parent=0 // pred_fallthru
    _
  // Predicated region
  $region6: #{forward.1} parent=0 // pred_check
    _
  $region7: #{forward.1} parent=0 // pred_check_branch
    %11 = sbr.rel (0) target = $region9
  $region8: #{forward.1} parent=0 // pred_region
    _
  $region9: #{forward.1} parent=0 // pred_fallthru
    _
  // Predicated region
  $region10: #{forward.1} parent=0 // pred_check
    _
  $region11: #{forward.1} parent=0 // pred_check_branch
    %13 = sbr.rel (0) target = $region13
  $region12: #{forward.1} parent=0 // pred_region
    _
  $region13: #{forward.1} parent=0 // pred_fallthru
    _
  %v15 = vld [vmem:[%s1] sm:$0xf]
  %v16 = vld [vmem:[%s1 + $0x8] sm:$0xf]
  %v17 = vld [vmem:[%s1 + $0x10] sm:$0xf]
  %v18 = vld [vmem:[%s1 + $0x18] sm:$0xf]
  %v19 = vld [vmem:[%s1 + $0x20] sm:$0xff]
  %v20 = vld [vmem:[%s1 + $0x28] sm:$0xff]
  %v21 = vld [vmem:[%s1 + $0x30] sm:$0xff]
  %v22 = vld [vmem:[%s1 + $0x38] sm:$0xff]
  %v23 = vld [vmem:[%s1 + $0x40] sm:$0xff]
  %v24 = vld [vmem:[%s1 + $0x48] sm:$0xff]
  %v25 = vld [vmem:[%s1 + $0x50] sm:$0xff]
  %v26 = vld [vmem:[%s1 + $0x58] sm:$0xff]
  %v27 = vld [vmem:[%s1 + $0x60] sm:$0xff]
  %v28 = vld [vmem:[%s1 + $0x68] sm:$0xff]
  %v29 = vld [vmem:[%s1 + $0x70] sm:$0xff]
  %v30 = vld [vmem:[%s1 + $0x78] sm:$0xff]
  %v31 = vld [vmem:[%s1 + $0x80] sm:$0xff]
  %v32 = vld [vmem:[%s1 + $0x88] sm:$0xff]
  %v33 = vld [vmem:[%s1 + $0x90] sm:$0xff]
  %v34 = vld [vmem:[%s1 + $0x98] sm:$0xff]
  %v35 = vld [vmem:[%s1 + $0xa0] sm:$0xff]
  %v36 = vld [vmem:[%s1 + $0xa8] sm:$0xff]
  %v37 = vld [vmem:[%s1 + $0xb0] sm:$0xff]
  %v38 = vld [vmem:[%s1 + $0xb8] sm:$0xff]
  %v39 = vld [vmem:[%s1 + $0xc0] sm:$0xff]
  %v40 = vld [vmem:[%s1 + $0xc8] sm:$0xff]
  %v41 = vld [vmem:[%s1 + $0xd0] sm:$0xff]
  %v42 = vld [vmem:[%s1 + $0xd8] sm:$0xff]
  %v43 = vld [vmem:[%s1 + $0xe0] sm:$0xff]
  %v44 = vld [vmem:[%s1 + $0xe8] sm:$0xff]
  %v45 = vld [vmem:[%s1 + $0xf0] sm:$0xff]
  %v46 = vld [vmem:[%s1 + $0xf8] sm:$0xff]
  %v47 = vld [vmem:[%s2] sm:$0xff]
  %v48 = vld [vmem:[%s2 + $0x8] sm:$0xff]
  %v49 = vld [vmem:[%s0] sm:$0xf]
  %v50 = vld [vmem:[%s0 + $0x4] sm:$0xf]
  %v51 = vld [vmem:[%s0 + $0x8] sm:$0xf]
  %v52 = vld [vmem:[%s0 + $0xc] sm:$0xf]
  %v53 = vld [vmem:[%s0 + $0x10] sm:$0xf]
  %v54 = vld [vmem:[%s0 + $0x14] sm:$0xf]
  %v55 = vld [vmem:[%s0 + $0x18] sm:$0xf]
  %v56 = vld [vmem:[%s0 + $0x1c] sm:$0xf]
  %v57 = vperm.slane %v47, 0
  %v66 = vunpack.c.l.b16 %v49
  %v67 = vunpack.c.l.b16 %v50
  %v68 = vunpack.c.l.b16 %v51
  %v69 = vunpack.c.l.b16 %v52
  %v70 = vunpack.c.l.b16 %v53
  %v71 = vunpack.c.l.b16 %v54
  %v72 = vunpack.c.l.b16 %v55
  %v73 = vunpack.c.l.b16 %v56
  %v74 = vpack.c.b16 %v67, %v66
  %v75 = vpack.c.b16 %v69, %v68
  %v76 = vpack.c.b16 %v71, %v70
  %v77 = vpack.c.b16 %v73, %v72
  %v82 = vunpack.c.l.b16 %v15
  %v83 = vunpack.c.l.b16 %v16
  %v84 = vunpack.c.l.b16 %v17
  %v85 = vunpack.c.l.b16 %v18
  %v86 = vpack.c.b16 %v83, %v82
  %v87 = vpack.c.b16 %v85, %v84
  %vm90 = vcmask 261120
  %v92 = vsel %vm90, %v74, 0
  %v95 = vsel %vm90, %v75, 0
  %v98 = vsel %vm90, %v76, 0
  %v101 = vsel %vm90, %v77, 0
  %103 = vmatpush.bf16.msra.mxu0 0
  %104 = vmatpush.bf16.msra.mxu0 0
  %105 = vmatpush.bf16.msra.mxu0 0
  %106 = vmatpush.bf16.msra.mxu0 0
  %107 = vmatpush.bf16.msra.mxu0 0
  %108 = vmatpush.bf16.msra.mxu0 0
  %109 = vmatpush.bf16.msra.mxu0 %v87
  %110 = vmatpush.bf16.msra.mxu0 %v86
  %111 = vmatmul.bf16.gmra.mxu0 %v92
  %v112 = vpop.f32.mrf.mxu0
  %v113 = vadd.f32 %v57, %v112
  %v114 = vpop.f32.mrf.mxu0
  %v115 = vadd.f32 %v57, %v114
  %116 = vmatmul.bf16.gmra.mxu0 %v95
  %v117 = vpop.f32.mrf.mxu0
  %v118 = vadd.f32 %v57, %v117
  %v119 = vpop.f32.mrf.mxu0
  %v120 = vadd.f32 %v57, %v119
  %121 = vmatmul.bf16.gmra.mxu0 %v98
  %v122 = vpop.f32.mrf.mxu0
  %v123 = vadd.f32 %v57, %v122
  %v124 = vpop.f32.mrf.mxu0
  %v125 = vadd.f32 %v57, %v124
  %126 = vmatmul.bf16.gmra.mxu0 %v101
  %v127 = vpop.f32.mrf.mxu0
  %v128 = vadd.f32 %v57, %v127
  %v129 = vpop.f32.mrf.mxu0
  %v130 = vadd.f32 %v57, %v129
  %131 = vdwg.mxu0
  %v132 = vtanh.pop %v113
  %v133 = vtanh.pop %v115
  %v134 = vtanh.pop %v118
  %v135 = vtanh.pop %v120
  %v136 = vtanh.pop %v123
  %v137 = vtanh.pop %v125
  %v138 = vtanh.pop %v128
  %v139 = vtanh.pop %v130
  %v140 = vpack.c.bf16 %v133, %v132
  %v141 = vpack.c.bf16 %v135, %v134
  %v142 = vpack.c.bf16 %v137, %v136
  %v143 = vpack.c.bf16 %v139, %v138
  %v144 = vperm.slane %v47, 1
  %v145 = vperm.slane %v48, 1
  %v150 = vunpack.c.l.b16 %v19
  %v151 = vunpack.c.h.b16 %v19
  %v152 = vunpack.c.l.b16 %v20
  %v153 = vunpack.c.h.b16 %v20
  %v154 = vunpack.c.l.b16 %v21
  %v155 = vunpack.c.h.b16 %v21
  %v156 = vunpack.c.l.b16 %v22
  %v157 = vunpack.c.h.b16 %v22
  %v158 = vpack.c.b16 %v152, %v150
  %v159 = vpack.c.b16 %v153, %v151
  %v160 = vpack.c.b16 %v156, %v154
  %v161 = vpack.c.b16 %v157, %v155
  %v167 = vsel %vm90, %v140, 0
  %v170 = vsel %vm90, %v141, 0
  %v173 = vsel %vm90, %v142, 0
  %v176 = vsel %vm90, %v143, 0
  %178 = vmatpush.bf16.msra.mxu0 0
  %179 = vmatpush.bf16.msra.mxu0 0
  %180 = vmatpush.bf16.msra.mxu0 0
  %181 = vmatpush.bf16.msra.mxu0 0
  %182 = vmatpush.bf16.msra.mxu0 0
  %183 = vmatpush.bf16.msra.mxu0 0
  %184 = vmatpush.bf16.msra.mxu0 %v160
  %185 = vmatpush.bf16.msra.mxu0 %v158
  %186 = vmatmul.bf16.gmra.mxu0 %v167
  %v187 = vpop.f32.mrf.mxu0
  %v188 = vadd.f32 %v144, %v187
  %v189 = vpop.f32.mrf.mxu0
  %v190 = vadd.f32 %v144, %v189
  %191 = vmatmul.bf16.gmra.mxu0 %v170
  %v192 = vpop.f32.mrf.mxu0
  %v193 = vadd.f32 %v144, %v192
  %v194 = vpop.f32.mrf.mxu0
  %v195 = vadd.f32 %v144, %v194
  %196 = vmatmul.bf16.gmra.mxu0 %v173
  %v197 = vpop.f32.mrf.mxu0
  %v198 = vadd.f32 %v144, %v197
  %v199 = vpop.f32.mrf.mxu0
  %v200 = vadd.f32 %v144, %v199
  %201 = vmatmul.bf16.gmra.mxu0 %v176
  %v202 = vpop.f32.mrf.mxu0
  %v203 = vadd.f32 %v144, %v202
  %v204 = vpop.f32.mrf.mxu0
  %v205 = vadd.f32 %v144, %v204
  %206 = vdwg.mxu0
  %207 = vmatpush.bf16.msra.mxu0 0
  %208 = vmatpush.bf16.msra.mxu0 0
  %209 = vmatpush.bf16.msra.mxu0 0
  %210 = vmatpush.bf16.msra.mxu0 0
  %211 = vmatpush.bf16.msra.mxu0 0
  %212 = vmatpush.bf16.msra.mxu0 0
  %213 = vmatpush.bf16.msra.mxu0 %v161
  %214 = vmatpush.bf16.msra.mxu0 %v159
  %215 = vmatmul.bf16.gmra.mxu0 %v167
  %v216 = vpop.f32.mrf.mxu0
  %v217 = vadd.f32 %v145, %v216
  %v218 = vpop.f32.mrf.mxu0
  %v219 = vadd.f32 %v145, %v218
  %220 = vmatmul.bf16.gmra.mxu0 %v170
  %v221 = vpop.f32.mrf.mxu0
  %v222 = vadd.f32 %v145, %v221
  %v223 = vpop.f32.mrf.mxu0
  %v224 = vadd.f32 %v145, %v223
  %225 = vmatmul.bf16.gmra.mxu0 %v173
  %v226 = vpop.f32.mrf.mxu0
  %v227 = vadd.f32 %v145, %v226
  %v228 = vpop.f32.mrf.mxu0
  %v229 = vadd.f32 %v145, %v228
  %230 = vmatmul.bf16.gmra.mxu0 %v176
  %v231 = vpop.f32.mrf.mxu0
  %v232 = vadd.f32 %v145, %v231
  %v233 = vpop.f32.mrf.mxu0
  %v234 = vadd.f32 %v145, %v233
  %235 = vdwg.mxu0
  %v236 = vlaneseq
  %v237 = vand.u32 %v236, 127
  %v238 = vadd.s32 %v237, 128
  %vm239 = vcmp.ge.s32.totalorder %v237, 128
  %vm240 = vcmp.ge.s32.totalorder %v238, 128
  %vm241 = vcmp.lt.s32.totalorder %v237, 192
  %vm242 = vcmp.lt.s32.totalorder %v238, 192
  %vm243 = vmand %vm239, %vm241
  %vm244 = vmand %vm240, %vm242
  %v253 = vunpack.c.l.b16 %v23
  %v254 = vunpack.c.h.b16 %v23
  %v255 = vunpack.c.l.b16 %v24
  %v256 = vunpack.c.h.b16 %v24
  %v257 = vunpack.c.l.b16 %v25
  %v258 = vunpack.c.h.b16 %v25
  %v259 = vunpack.c.l.b16 %v26
  %v260 = vunpack.c.h.b16 %v26
  %v261 = vunpack.c.l.b16 %v27
  %v262 = vunpack.c.h.b16 %v27
  %v263 = vunpack.c.l.b16 %v28
  %v264 = vunpack.c.h.b16 %v28
  %v265 = vunpack.c.l.b16 %v29
  %v266 = vunpack.c.h.b16 %v29
  %v267 = vunpack.c.l.b16 %v30
  %v268 = vunpack.c.h.b16 %v30
  %v269 = vpack.c.b16 %v255, %v253
  %v270 = vpack.c.b16 %v256, %v254
  %v271 = vpack.c.b16 %v259, %v257
  %v272 = vpack.c.b16 %v260, %v258
  %v273 = vpack.c.b16 %v263, %v261
  %v274 = vpack.c.b16 %v264, %v262
  %v275 = vpack.c.b16 %v267, %v265
  %v276 = vpack.c.b16 %v268, %v266
  %vm285 = vcmask 523264
  %v287 = vsel %vm285, 0, 0
  %289 = vmatpush.bf16.msra.mxu0 0
  %290 = vmatpush.bf16.msra.mxu0 0
  %291 = vmatpush.bf16.msra.mxu0 0
  %292 = vmatpush.bf16.msra.mxu0 0
  %293 = vmatpush.bf16.msra.mxu0 %v275
  %294 = vmatpush.bf16.msra.mxu0 %v273
  %295 = vmatpush.bf16.msra.mxu0 %v271
  %296 = vmatpush.bf16.msra.mxu0 %v269
  %297 = vmatmul.bf16.gmra.mxu0 %v287
  %v298 = vpop.f32.mrf.mxu0
  %v299 = vadd.f32 0.0, %v298
  %v300 = vpop.f32.mrf.mxu0
  %301 = vdwg.mxu0
  %302 = vmatpush.bf16.msra.mxu0 0
  %303 = vmatpush.bf16.msra.mxu0 0
  %304 = vmatpush.bf16.msra.mxu0 0
  %305 = vmatpush.bf16.msra.mxu0 0
  %306 = vmatpush.bf16.msra.mxu0 %v276
  %307 = vmatpush.bf16.msra.mxu0 %v274
  %308 = vmatpush.bf16.msra.mxu0 %v272
  %309 = vmatpush.bf16.msra.mxu0 %v270
  %310 = vmatmul.bf16.gmra.mxu0 %v287
  %v311 = vpop.f32.mrf.mxu0
  %v312 = vadd.f32 0.0, %v311
  %v313 = vpop.f32.mrf.mxu0
  %314 = vdwg.mxu0
  %v315 = vadd.f32 %v188, %v299
  %v316 = vadd.f32 %v217, %v312
  %v317 = vtanh.pop %v315
  %v318 = vtanh.pop %v316
  %v319 = vmul.f32 %v317, 0.5
  %v320 = vmul.f32 %v318, 0.5
  %v321 = vadd.f32 %v319, 0.5
  %v322 = vadd.f32 %v320, 0.5
  %v323 = vsel %vm243, %v317, %v321
  %v324 = vsel %vm244, %v318, %v322
  %v325 = vmul.f32 %v323, 0.0
  %v326 = vmul.f32 %v323, %v324
  %328 = vrot.lane.b32.xlu0 %v326, 64
  %v329 = vpop.permute.xlu0 %328
  %v331 = vadd.f32 %v325, %v329
  %v332 = vtanh.pop %v331
  %v333 = vmul.f32 %v324, %v332
  %v334 = vpack.c.bf16 %v333, %v333
  %336 = vrot.lane.b32.xlu0 %v334, 64
  %v337 = vpop.permute.xlu0 %336
  %v339 = vsel %vm285, %v337, 0
  %341 = vmatpush.bf16.msra.mxu0 0
  %342 = vmatpush.bf16.msra.mxu0 0
  %343 = vmatpush.bf16.msra.mxu0 0
  %344 = vmatpush.bf16.msra.mxu0 0
  %345 = vmatpush.bf16.msra.mxu0 %v275
  %346 = vmatpush.bf16.msra.mxu0 %v273
  %347 = vmatpush.bf16.msra.mxu0 %v271
  %348 = vmatpush.bf16.msra.mxu0 %v269
  %349 = vmatmul.bf16.gmra.mxu0 %v339
  %v350 = vpop.f32.mrf.mxu0
  %v351 = vadd.f32 0.0, %v350
  %v352 = vpop.f32.mrf.mxu0
  %353 = vdwg.mxu0
  %354 = vmatpush.bf16.msra.mxu0 0
  %355 = vmatpush.bf16.msra.mxu0 0
  %356 = vmatpush.bf16.msra.mxu0 0
  %357 = vmatpush.bf16.msra.mxu0 0
  %358 = vmatpush.bf16.msra.mxu0 %v276
  %359 = vmatpush.bf16.msra.mxu0 %v274
  %360 = vmatpush.bf16.msra.mxu0 %v272
  %361 = vmatpush.bf16.msra.mxu0 %v270
  %362 = vmatmul.bf16.gmra.mxu0 %v339
  %v363 = vpop.f32.mrf.mxu0
  %v364 = vadd.f32 0.0, %v363
  %v365 = vpop.f32.mrf.mxu0
  %366 = vdwg.mxu0
  %v367 = vadd.f32 %v190, %v351
  %v368 = vadd.f32 %v219, %v364
  %v369 = vtanh.pop %v367
  %v370 = vtanh.pop %v368
  %v371 = vmul.f32 %v369, 0.5
  %v372 = vmul.f32 %v370, 0.5
  %v373 = vadd.f32 %v371, 0.5
  %v374 = vadd.f32 %v372, 0.5
  %v375 = vsel %vm243, %v369, %v373
  %v376 = vsel %vm244, %v370, %v374
  %v377 = vmul.f32 %v375, %v331
  %v378 = vmul.f32 %v375, %v376
  %380 = vrot.lane.b32.xlu0 %v378, 64
  %v381 = vpop.permute.xlu0 %380
  %v383 = vadd.f32 %v377, %v381
  %v384 = vtanh.pop %v383
  %v385 = vmul.f32 %v376, %v384
  %v386 = vpack.c.bf16 %v385, %v385
  %388 = vrot.lane.b32.xlu0 %v386, 64
  %v389 = vpop.permute.xlu0 %388
  %v391 = vsel %vm285, %v389, 0
  %393 = vmatpush.bf16.msra.mxu0 0
  %394 = vmatpush.bf16.msra.mxu0 0
  %395 = vmatpush.bf16.msra.mxu0 0
  %396 = vmatpush.bf16.msra.mxu0 0
  %397 = vmatpush.bf16.msra.mxu0 %v275
  %398 = vmatpush.bf16.msra.mxu0 %v273
  %399 = vmatpush.bf16.msra.mxu0 %v271
  %400 = vmatpush.bf16.msra.mxu0 %v269
  %401 = vmatmul.bf16.gmra.mxu0 %v391
  %v402 = vpop.f32.mrf.mxu0
  %v403 = vadd.f32 0.0, %v402
  %v404 = vpop.f32.mrf.mxu0
  %405 = vdwg.mxu0
  %406 = vmatpush.bf16.msra.mxu0 0
  %407 = vmatpush.bf16.msra.mxu0 0
  %408 = vmatpush.bf16.msra.mxu0 0
  %409 = vmatpush.bf16.msra.mxu0 0
  %410 = vmatpush.bf16.msra.mxu0 %v276
  %411 = vmatpush.bf16.msra.mxu0 %v274
  %412 = vmatpush.bf16.msra.mxu0 %v272
  %413 = vmatpush.bf16.msra.mxu0 %v270
  %414 = vmatmul.bf16.gmra.mxu0 %v391
  %v415 = vpop.f32.mrf.mxu0
  %v416 = vadd.f32 0.0, %v415
  %v417 = vpop.f32.mrf.mxu0
  %418 = vdwg.mxu0
  %v419 = vadd.f32 %v193, %v403
  %v420 = vadd.f32 %v222, %v416
  %v421 = vtanh.pop %v419
  %v422 = vtanh.pop %v420
  %v423 = vmul.f32 %v421, 0.5
  %v424 = vmul.f32 %v422, 0.5
  %v425 = vadd.f32 %v423, 0.5
  %v426 = vadd.f32 %v424, 0.5
  %v427 = vsel %vm243, %v421, %v425
  %v428 = vsel %vm244, %v422, %v426
  %v429 = vmul.f32 %v427, %v383
  %v430 = vmul.f32 %v427, %v428
  %432 = vrot.lane.b32.xlu0 %v430, 64
  %v433 = vpop.permute.xlu0 %432
  %v435 = vadd.f32 %v429, %v433
  %v436 = vtanh.pop %v435
  %v437 = vmul.f32 %v428, %v436
  %v438 = vpack.c.bf16 %v437, %v437
  %440 = vrot.lane.b32.xlu0 %v438, 64
  %v441 = vpop.permute.xlu0 %440
  %v443 = vsel %vm285, %v441, 0
  %445 = vmatpush.bf16.msra.mxu0 0
  %446 = vmatpush.bf16.msra.mxu0 0
  %447 = vmatpush.bf16.msra.mxu0 0
  %448 = vmatpush.bf16.msra.mxu0 0
  %449 = vmatpush.bf16.msra.mxu0 %v275
  %450 = vmatpush.bf16.msra.mxu0 %v273
  %451 = vmatpush.bf16.msra.mxu0 %v271
  %452 = vmatpush.bf16.msra.mxu0 %v269
  %453 = vmatmul.bf16.gmra.mxu0 %v443
  %v454 = vpop.f32.mrf.mxu0
  %v455 = vadd.f32 0.0, %v454
  %v456 = vpop.f32.mrf.mxu0
  %457 = vdwg.mxu0
  %458 = vmatpush.bf16.msra.mxu0 0
  %459 = vmatpush.bf16.msra.mxu0 0
  %460 = vmatpush.bf16.msra.mxu0 0
  %461 = vmatpush.bf16.msra.mxu0 0
  %462 = vmatpush.bf16.msra.mxu0 %v276
  %463 = vmatpush.bf16.msra.mxu0 %v274
  %464 = vmatpush.bf16.msra.mxu0 %v272
  %465 = vmatpush.bf16.msra.mxu0 %v270
  %466 = vmatmul.bf16.gmra.mxu0 %v443
  %v467 = vpop.f32.mrf.mxu0
  %v468 = vadd.f32 0.0, %v467
  %v469 = vpop.f32.mrf.mxu0
  %470 = vdwg.mxu0
  %v471 = vadd.f32 %v195, %v455
  %v472 = vadd.f32 %v224, %v468
  %v473 = vtanh.pop %v471
  %v474 = vtanh.pop %v472
  %v475 = vmul.f32 %v473, 0.5
  %v476 = vmul.f32 %v474, 0.5
  %v477 = vadd.f32 %v475, 0.5
  %v478 = vadd.f32 %v476, 0.5
  %v479 = vsel %vm243, %v473, %v477
  %v480 = vsel %vm244, %v474, %v478
  %v481 = vmul.f32 %v479, %v435
  %v482 = vmul.f32 %v479, %v480
  %484 = vrot.lane.b32.xlu0 %v482, 64
  %v485 = vpop.permute.xlu0 %484
  %v487 = vadd.f32 %v481, %v485
  %v488 = vtanh.pop %v487
  %v489 = vmul.f32 %v480, %v488
  %v490 = vpack.c.bf16 %v489, %v489
  %492 = vrot.lane.b32.xlu0 %v490, 64
  %v493 = vpop.permute.xlu0 %492
  %v495 = vsel %vm285, %v493, 0
  %497 = vmatpush.bf16.msra.mxu0 0
  %498 = vmatpush.bf16.msra.mxu0 0
  %499 = vmatpush.bf16.msra.mxu0 0
  %500 = vmatpush.bf16.msra.mxu0 0
  %501 = vmatpush.bf16.msra.mxu0 %v275
  %502 = vmatpush.bf16.msra.mxu0 %v273
  %503 = vmatpush.bf16.msra.mxu0 %v271
  %504 = vmatpush.bf16.msra.mxu0 %v269
  %505 = vmatmul.bf16.gmra.mxu0 %v495
  %v506 = vpop.f32.mrf.mxu0
  %v507 = vadd.f32 0.0, %v506
  %v508 = vpop.f32.mrf.mxu0
  %509 = vdwg.mxu0
  %510 = vmatpush.bf16.msra.mxu0 0
  %511 = vmatpush.bf16.msra.mxu0 0
  %512 = vmatpush.bf16.msra.mxu0 0
  %513 = vmatpush.bf16.msra.mxu0 0
  %514 = vmatpush.bf16.msra.mxu0 %v276
  %515 = vmatpush.bf16.msra.mxu0 %v274
  %516 = vmatpush.bf16.msra.mxu0 %v272
  %517 = vmatpush.bf16.msra.mxu0 %v270
  %518 = vmatmul.bf16.gmra.mxu0 %v495
  %v519 = vpop.f32.mrf.mxu0
  %v520 = vadd.f32 0.0, %v519
  %v521 = vpop.f32.mrf.mxu0
  %522 = vdwg.mxu0
  %v523 = vadd.f32 %v198, %v507
  %v524 = vadd.f32 %v227, %v520
  %v525 = vtanh.pop %v523
  %v526 = vtanh.pop %v524
  %v527 = vmul.f32 %v525, 0.5
  %v528 = vmul.f32 %v526, 0.5
  %v529 = vadd.f32 %v527, 0.5
  %v530 = vadd.f32 %v528, 0.5
  %v531 = vsel %vm243, %v525, %v529
  %v532 = vsel %vm244, %v526, %v530
  %v533 = vmul.f32 %v531, %v487
  %v534 = vmul.f32 %v531, %v532
  %536 = vrot.lane.b32.xlu0 %v534, 64
  %v537 = vpop.permute.xlu0 %536
  %v539 = vadd.f32 %v533, %v537
  %v540 = vtanh.pop %v539
  %v541 = vmul.f32 %v532, %v540
  %v542 = vpack.c.bf16 %v541, %v541
  %544 = vrot.lane.b32.xlu0 %v542, 64
  %v545 = vpop.permute.xlu0 %544
  %v547 = vsel %vm285, %v545, 0
  %549 = vmatpush.bf16.msra.mxu0 0
  %550 = vmatpush.bf16.msra.mxu0 0
  %551 = vmatpush.bf16.msra.mxu0 0
  %552 = vmatpush.bf16.msra.mxu0 0
  %553 = vmatpush.bf16.msra.mxu0 %v275
  %554 = vmatpush.bf16.msra.mxu0 %v273
  %555 = vmatpush.bf16.msra.mxu0 %v271
  %556 = vmatpush.bf16.msra.mxu0 %v269
  %557 = vmatmul.bf16.gmra.mxu0 %v547
  %v558 = vpop.f32.mrf.mxu0
  %v559 = vadd.f32 0.0, %v558
  %v560 = vpop.f32.mrf.mxu0
  %561 = vdwg.mxu0
  %562 = vmatpush.bf16.msra.mxu0 0
  %563 = vmatpush.bf16.msra.mxu0 0
  %564 = vmatpush.bf16.msra.mxu0 0
  %565 = vmatpush.bf16.msra.mxu0 0
  %566 = vmatpush.bf16.msra.mxu0 %v276
  %567 = vmatpush.bf16.msra.mxu0 %v274
  %568 = vmatpush.bf16.msra.mxu0 %v272
  %569 = vmatpush.bf16.msra.mxu0 %v270
  %570 = vmatmul.bf16.gmra.mxu0 %v547
  %v571 = vpop.f32.mrf.mxu0
  %v572 = vadd.f32 0.0, %v571
  %v573 = vpop.f32.mrf.mxu0
  %574 = vdwg.mxu0
  %v575 = vadd.f32 %v200, %v559
  %v576 = vadd.f32 %v229, %v572
  %v577 = vtanh.pop %v575
  %v578 = vtanh.pop %v576
  %v579 = vmul.f32 %v577, 0.5
  %v580 = vmul.f32 %v578, 0.5
  %v581 = vadd.f32 %v579, 0.5
  %v582 = vadd.f32 %v580, 0.5
  %v583 = vsel %vm243, %v577, %v581
  %v584 = vsel %vm244, %v578, %v582
  %v585 = vmul.f32 %v583, %v539
  %v586 = vmul.f32 %v583, %v584
  %588 = vrot.lane.b32.xlu0 %v586, 64
  %v589 = vpop.permute.xlu0 %588
  %v591 = vadd.f32 %v585, %v589
  %v592 = vtanh.pop %v591
  %v593 = vmul.f32 %v584, %v592
  %v594 = vpack.c.bf16 %v593, %v593
  %596 = vrot.lane.b32.xlu0 %v594, 64
  %v597 = vpop.permute.xlu0 %596
  %v599 = vsel %vm285, %v597, 0
  %601 = vmatpush.bf16.msra.mxu0 0
  %602 = vmatpush.bf16.msra.mxu0 0
  %603 = vmatpush.bf16.msra.mxu0 0
  %604 = vmatpush.bf16.msra.mxu0 0
  %605 = vmatpush.bf16.msra.mxu0 %v275
  %606 = vmatpush.bf16.msra.mxu0 %v273
  %607 = vmatpush.bf16.msra.mxu0 %v271
  %608 = vmatpush.bf16.msra.mxu0 %v269
  %609 = vmatmul.bf16.gmra.mxu0 %v599
  %v610 = vpop.f32.mrf.mxu0
  %v611 = vadd.f32 0.0, %v610
  %v612 = vpop.f32.mrf.mxu0
  %613 = vdwg.mxu0
  %614 = vmatpush.bf16.msra.mxu0 0
  %615 = vmatpush.bf16.msra.mxu0 0
  %616 = vmatpush.bf16.msra.mxu0 0
  %617 = vmatpush.bf16.msra.mxu0 0
  %618 = vmatpush.bf16.msra.mxu0 %v276
  %619 = vmatpush.bf16.msra.mxu0 %v274
  %620 = vmatpush.bf16.msra.mxu0 %v272
  %621 = vmatpush.bf16.msra.mxu0 %v270
  %622 = vmatmul.bf16.gmra.mxu0 %v599
  %v623 = vpop.f32.mrf.mxu0
  %v624 = vadd.f32 0.0, %v623
  %v625 = vpop.f32.mrf.mxu0
  %626 = vdwg.mxu0
  %v627 = vadd.f32 %v203, %v611
  %v628 = vadd.f32 %v232, %v624
  %v629 = vtanh.pop %v627
  %v630 = vtanh.pop %v628
  %v631 = vmul.f32 %v629, 0.5
  %v632 = vmul.f32 %v630, 0.5
  %v633 = vadd.f32 %v631, 0.5
  %v634 = vadd.f32 %v632, 0.5
  %v635 = vsel %vm243, %v629, %v633
  %v636 = vsel %vm244, %v630, %v634
  %v637 = vmul.f32 %v635, %v591
  %v638 = vmul.f32 %v635, %v636
  %640 = vrot.lane.b32.xlu0 %v638, 64
  %v641 = vpop.permute.xlu0 %640
  %v643 = vadd.f32 %v637, %v641
  %v644 = vtanh.pop %v643
  %v645 = vmul.f32 %v636, %v644
  %v646 = vpack.c.bf16 %v645, %v645
  %648 = vrot.lane.b32.xlu0 %v646, 64
  %v649 = vpop.permute.xlu0 %648
  %v651 = vsel %vm285, %v649, 0
  %653 = vmatpush.bf16.msra.mxu0 0
  %654 = vmatpush.bf16.msra.mxu0 0
  %655 = vmatpush.bf16.msra.mxu0 0
  %656 = vmatpush.bf16.msra.mxu0 0
  %657 = vmatpush.bf16.msra.mxu0 %v275
  %658 = vmatpush.bf16.msra.mxu0 %v273
  %659 = vmatpush.bf16.msra.mxu0 %v271
  %660 = vmatpush.bf16.msra.mxu0 %v269
  %661 = vmatmul.bf16.gmra.mxu0 %v651
  %v662 = vpop.f32.mrf.mxu0
  %v663 = vadd.f32 0.0, %v662
  %v664 = vpop.f32.mrf.mxu0
  %665 = vdwg.mxu0
  %666 = vmatpush.bf16.msra.mxu0 0
  %667 = vmatpush.bf16.msra.mxu0 0
  %668 = vmatpush.bf16.msra.mxu0 0
  %669 = vmatpush.bf16.msra.mxu0 0
  %670 = vmatpush.bf16.msra.mxu0 %v276
  %671 = vmatpush.bf16.msra.mxu0 %v274
  %672 = vmatpush.bf16.msra.mxu0 %v272
  %673 = vmatpush.bf16.msra.mxu0 %v270
  %674 = vmatmul.bf16.gmra.mxu0 %v651
  %v675 = vpop.f32.mrf.mxu0
  %v676 = vadd.f32 0.0, %v675
  %v677 = vpop.f32.mrf.mxu0
  %678 = vdwg.mxu0
  %v679 = vadd.f32 %v205, %v663
  %v680 = vadd.f32 %v234, %v676
  %v681 = vtanh.pop %v679
  %v682 = vtanh.pop %v680
  %v683 = vmul.f32 %v681, 0.5
  %v684 = vmul.f32 %v682, 0.5
  %v685 = vadd.f32 %v683, 0.5
  %v686 = vadd.f32 %v684, 0.5
  %v687 = vsel %vm243, %v681, %v685
  %v688 = vsel %vm244, %v682, %v686
  %v689 = vmul.f32 %v687, %v643
  %v690 = vmul.f32 %v687, %v688
  %692 = vrot.lane.b32.xlu0 %v690, 64
  %v693 = vpop.permute.xlu0 %692
  %v695 = vadd.f32 %v689, %v693
  %v696 = vtanh.pop %v695
  %v697 = vmul.f32 %v688, %v696
  %699 = vrot.lane.b32.xlu0 %v333, 64
  %v700 = vpop.permute.xlu0 %699
  %703 = vrot.lane.b32.xlu0 %v697, 64
  %v704 = vpop.permute.xlu0 %703
  %v706 = vsel %vm90, %v700, %v704
  %708 = vrot.lane.b32.xlu0 %v385, 64
  %v709 = vpop.permute.xlu0 %708
  %712 = vrot.lane.b32.xlu0 %v645, 64
  %v713 = vpop.permute.xlu0 %712
  %v715 = vsel %vm90, %v709, %v713
  %717 = vrot.lane.b32.xlu0 %v437, 64
  %v718 = vpop.permute.xlu0 %717
  %721 = vrot.lane.b32.xlu0 %v593, 64
  %v722 = vpop.permute.xlu0 %721
  %v724 = vsel %vm90, %v718, %v722
  %726 = vrot.lane.b32.xlu0 %v489, 64
  %v727 = vpop.permute.xlu0 %726
  %730 = vrot.lane.b32.xlu0 %v541, 64
  %v731 = vpop.permute.xlu0 %730
  %v733 = vsel %vm90, %v727, %v731
  %v734 = vsel %vm90, %v731, %v727
  %v735 = vsel %vm90, %v722, %v718
  %v736 = vsel %vm90, %v713, %v709
  %v737 = vsel %vm90, %v704, %v700
  %v738 = vmul.f32 %v706, %v704
  %v739 = vsel %vm285, %v738, 0.0
  %740 = vadd.xlane.f32.xlu0 %v739
  %v741 = vpop.xlane.xlu0 %740
  %v742 = vmul.f32 %v715, %v704
  %v743 = vsel %vm285, %v742, 0.0
  %744 = vadd.xlane.f32.xlu0 %v743
  %v745 = vpop.xlane.xlu0 %744
  %v746 = vmul.f32 %v724, %v704
  %v747 = vsel %vm285, %v746, 0.0
  %748 = vadd.xlane.f32.xlu0 %v747
  %v749 = vpop.xlane.xlu0 %748
  %v750 = vmul.f32 %v733, %v704
  %v751 = vsel %vm285, %v750, 0.0
  %752 = vadd.xlane.f32.xlu0 %v751
  %v753 = vpop.xlane.xlu0 %752
  %v754 = vmul.f32 %v734, %v704
  %v755 = vsel %vm285, %v754, 0.0
  %756 = vadd.xlane.f32.xlu0 %v755
  %v757 = vpop.xlane.xlu0 %756
  %v758 = vmul.f32 %v735, %v704
  %v759 = vsel %vm285, %v758, 0.0
  %760 = vadd.xlane.f32.xlu0 %v759
  %v761 = vpop.xlane.xlu0 %760
  %v762 = vmul.f32 %v736, %v704
  %v763 = vsel %vm285, %v762, 0.0
  %764 = vadd.xlane.f32.xlu0 %v763
  %v765 = vpop.xlane.xlu0 %764
  %v766 = vmul.f32 %v737, %v704
  %v767 = vsel %vm285, %v766, 0.0
  %768 = vadd.xlane.f32.xlu0 %v767
  %v769 = vpop.xlane.xlu0 %768
  %vm770 = vcmask 7168
  %v771 = vsel %vm770, %v741, %v745
  %vm772 = vcmask 15360
  %v773 = vsel %vm772, %v771, %v749
  %vm774 = vcmask 23552
  %v775 = vsel %vm774, %v773, %v753
  %vm776 = vcmask 31744
  %v777 = vsel %vm776, %v775, %v757
  %vm778 = vcmask 39936
  %v779 = vsel %vm778, %v777, %v761
  %vm780 = vcmask 48128
  %v781 = vsel %vm780, %v779, %v765
  %vm782 = vcmask 56320
  %v783 = vsel %vm782, %v781, %v769
  %vm784 = vcmask 64512
  %v785 = vsel %vm784, %v783, -inf
  %786 = vmax.xlane.f32.xlu0 %v785
  %v787 = vpop.xlane.xlu0 %786
  %v788 = vsub.f32 %v783, %v787
  %v789 = vmul.f32 %v788, 1.442695
  %v790 = vpow.pop %v789
  %v791 = vsel %vm784, %v790, 0.0
  %792 = vadd.xlane.f32.xlu0 %v791
  %v793 = vpop.xlane.xlu0 %792
  %v794 = vrcp.pop %v793
  %v795 = vmul.f32 %v790, %v794
  %797 = vset.pattern.permute.xlu0 0
  %798 = vperm.xlu0 %797, %v795
  %v799 = vpop.permute.xlu0 %798
  %v801 = vmul.f32 %v706, %v799
  %802 = vset.pattern.permute.xlu0 1
  %803 = vperm.xlu0 %802, %v795
  %v804 = vpop.permute.xlu0 %803
  %v806 = vmul.f32 %v715, %v804
  %v807 = vadd.f32 %v801, %v806
  %808 = vset.pattern.permute.xlu0 2
  %809 = vperm.xlu0 %808, %v795
  %v810 = vpop.permute.xlu0 %809
  %v812 = vmul.f32 %v724, %v810
  %v813 = vadd.f32 %v807, %v812
  %814 = vset.pattern.permute.xlu0 3
  %815 = vperm.xlu0 %814, %v795
  %v816 = vpop.permute.xlu0 %815
  %v818 = vmul.f32 %v733, %v816
  %v819 = vadd.f32 %v813, %v818
  %820 = vset.pattern.permute.xlu0 4
  %821 = vperm.xlu0 %820, %v795
  %v822 = vpop.permute.xlu0 %821
  %v824 = vmul.f32 %v734, %v822
  %v825 = vadd.f32 %v819, %v824
  %826 = vset.pattern.permute.xlu0 5
  %827 = vperm.xlu0 %826, %v795
  %v828 = vpop.permute.xlu0 %827
  %v830 = vmul.f32 %v735, %v828
  %v831 = vadd.f32 %v825, %v830
  %832 = vset.pattern.permute.xlu0 6
  %833 = vperm.xlu0 %832, %v795
  %v834 = vpop.permute.xlu0 %833
  %v836 = vmul.f32 %v736, %v834
  %v837 = vadd.f32 %v831, %v836
  %838 = vset.pattern.permute.xlu0 7
  %839 = vperm.xlu0 %838, %v795
  %v840 = vpop.permute.xlu0 %839
  %v842 = vmul.f32 %v737, %v840
  %v843 = vadd.f32 %v837, %v842
  %v844 = vsel %vm285, %v843, %v697
  %v845 = vpack.c.bf16 %v844, %v844
  %v846 = vperm.slane %v47, 2
  %v847 = vperm.slane %v48, 2
  %v864 = vunpack.c.l.b16 %v31
  %v865 = vunpack.c.h.b16 %v31
  %v866 = vunpack.c.l.b16 %v32
  %v867 = vunpack.c.h.b16 %v32
  %v868 = vunpack.c.l.b16 %v33
  %v869 = vunpack.c.h.b16 %v33
  %v870 = vunpack.c.l.b16 %v34
  %v871 = vunpack.c.h.b16 %v34
  %v872 = vunpack.c.l.b16 %v35
  %v873 = vunpack.c.h.b16 %v35
  %v874 = vunpack.c.l.b16 %v36
  %v875 = vunpack.c.h.b16 %v36
  %v876 = vunpack.c.l.b16 %v37
  %v877 = vunpack.c.h.b16 %v37
  %v878 = vunpack.c.l.b16 %v38
  %v879 = vunpack.c.h.b16 %v38
  %v880 = vunpack.c.l.b16 %v39
  %v881 = vunpack.c.h.b16 %v39
  %v882 = vunpack.c.l.b16 %v40
  %v883 = vunpack.c.h.b16 %v40
  %v884 = vunpack.c.l.b16 %v41
  %v885 = vunpack.c.h.b16 %v41
  %v886 = vunpack.c.l.b16 %v42
  %v887 = vunpack.c.h.b16 %v42
  %v888 = vunpack.c.l.b16 %v43
  %v889 = vunpack.c.h.b16 %v43
  %v890 = vunpack.c.l.b16 %v44
  %v891 = vunpack.c.h.b16 %v44
  %v892 = vunpack.c.l.b16 %v45
  %v893 = vunpack.c.h.b16 %v45
  %v894 = vunpack.c.l.b16 %v46
  %v895 = vunpack.c.h.b16 %v46
  %v896 = vpack.c.b16 %v866, %v864
  %v897 = vpack.c.b16 %v867, %v865
  %v898 = vpack.c.b16 %v870, %v868
  %v899 = vpack.c.b16 %v871, %v869
  %v900 = vpack.c.b16 %v874, %v872
  %v901 = vpack.c.b16 %v875, %v873
  %v902 = vpack.c.b16 %v878, %v876
  %v903 = vpack.c.b16 %v879, %v877
  %v904 = vpack.c.b16 %v882, %v880
  %v905 = vpack.c.b16 %v883, %v881
  %v906 = vpack.c.b16 %v886, %v884
  %v907 = vpack.c.b16 %v887, %v885
  %v908 = vpack.c.b16 %v890, %v888
  %v909 = vpack.c.b16 %v891, %v889
  %v910 = vpack.c.b16 %v894, %v892
  %v911 = vpack.c.b16 %v895, %v893
  %928 = vmatpush.bf16.msra.mxu0 %v910
  %929 = vmatpush.bf16.msra.mxu0 %v908
  %930 = vmatpush.bf16.msra.mxu0 %v906
  %931 = vmatpush.bf16.msra.mxu0 %v904
  %932 = vmatpush.bf16.msra.mxu0 %v902
  %933 = vmatpush.bf16.msra.mxu0 %v900
  %934 = vmatpush.bf16.msra.mxu0 %v898
  %935 = vmatpush.bf16.msra.mxu0 %v896
  %936 = vmatmul.bf16.gmra.mxu0 %v845
  %v937 = vpop.f32.mrf.mxu0
  %v938 = vadd.f32 %v846, %v937
  %v939 = vpop.f32.mrf.mxu0
  %940 = vdwg.mxu0
  %941 = vmatpush.bf16.msra.mxu0 %v911
  %942 = vmatpush.bf16.msra.mxu0 %v909
  %943 = vmatpush.bf16.msra.mxu0 %v907
  %944 = vmatpush.bf16.msra.mxu0 %v905
  %945 = vmatpush.bf16.msra.mxu0 %v903
  %946 = vmatpush.bf16.msra.mxu0 %v901
  %947 = vmatpush.bf16.msra.mxu0 %v899
  %948 = vmatpush.bf16.msra.mxu0 %v897
  %949 = vmatmul.bf16.gmra.mxu0 %v845
  %v950 = vpop.f32.mrf.mxu0
  %v951 = vadd.f32 %v847, %v950
  %v952 = vpop.f32.mrf.mxu0
  %953 = vdwg.mxu0
  %954 = vst [vmem:[%s3] sm:$0xff] %v938
  %955 = vst [vmem:[%s3 + $0x8] sm:$0xff] %v951
  // Predicated region
  $region14: #{forward.1} parent=0 // pred_check
    _
  $region15: #{forward.1} parent=0 // pred_check_branch
    %957 = sbr.rel (0) target = $region17
  $region16: #{forward.1} parent=0 // pred_region
    _
  $region17: #{forward.1} parent=0 // pred_fallthru
    _
  // Predicated region
  $region18: #{forward.1} parent=0 // pred_check
    _
  $region19: #{forward.1} parent=0 // pred_check_branch
    %959 = sbr.rel (0) target = $region21
  $region20: #{forward.1} parent=0 // pred_region
    _
  $region21: #{forward.1} parent=0 // pred_fallthru
    _

</llo_original>
